<compile_context>
chip_gen: v7x
topology: tpu7x:2x2x1
jax: 0.10.0
libtpu: 0.0.40
codegen_flags: <defaults>
</compile_context>

<pallas_src>
import math
import functools

import jax
import jax.numpy as jnp
from jax.experimental import pallas as pl
from jax.experimental.pallas import tpu as pltpu


_EXPONENT = math.log(10.0)   # modified_sigmoid exponent
_MAX_VALUE = 2.0
_THRESHOLD = 1e-7


def _round_up(n, m):
    return ((n + m - 1) // m) * m


def _noise_head_kernel(x_ref, w_ref, b_ref, o_ref):
    # x_ref: (TM, K) input dtype; w_ref: (K, N) input dtype; b_ref: (1, N) f32;
    # o_ref: (TM, N) f32 with N a multiple of 128 -> unmasked lane-dense stores.
    y = jnp.dot(x_ref[...], w_ref[...], preferred_element_type=jnp.float32)
    y = y + b_ref[...]
    # modified_sigmoid(y) = 2*sigmoid(y)**log(10) + 1e-7
    #                     = 2*exp(log(10) * log_sigmoid(y)) + 1e-7
    # stable log_sigmoid(y) = -(max(-y, 0) + log(1 + exp(-|y|)))
    log_sig = -(jnp.maximum(-y, 0.0) + jnp.log(1.0 + jnp.exp(-jnp.abs(y))))
    o_ref[...] = (_MAX_VALUE * jnp.exp(_EXPONENT * log_sig)
                  + _THRESHOLD).astype(o_ref.dtype)


@functools.partial(jax.jit, static_argnames=("block_rows",))
def noise_head(x, weight, bias, block_rows=1024):
    """x: (B, T, in_size); weight: (nfb, in_size); bias: (nfb,) -> (B, T, nfb) f32."""
    B, T, in_size = x.shape
    nfb = weight.shape[0]
    M = B * T

    # Row-packing factor so the kernel's output last dim is a multiple of 128 lanes.
    if nfb % 128 == 0:
        p = 1
    elif 128 % nfb == 0:
        p = 128 // nfb
    else:
        p = 1  # TODO(synk): general lane packing when nfb does not divide 128 (falls back to masked stores)

    K, N = p * in_size, p * nfb

    # Pack p consecutive rows into one kernel row via a block-diagonal weight.
    w_t = weight.T.astype(x.dtype)                        # (in_size, nfb)
    if p > 1:
        w_blk = jnp.zeros((K, N), dtype=w_t.dtype)
        for r in range(p):
            w_blk = w_blk.at[r * in_size:(r + 1) * in_size,
                             r * nfb:(r + 1) * nfb].set(w_t)
        b_blk = jnp.tile(bias.astype(jnp.float32), p).reshape(1, N)
    else:
        w_blk = w_t
        b_blk = bias.astype(jnp.float32).reshape(1, N)

    # Row tiling on the packed slab: big tiles to amortize per-step overhead,
    # multiple of 8 sublanes; tail handled by zero-padding the row count.
    Mp = pl.cdiv(M, p)                                    # packed rows needed
    tmp = max(8, min(block_rows // p, _round_up(Mp, 8)))
    tmp = _round_up(tmp, 8)
    Mp_pad = _round_up(Mp, tmp)

    x2d = x.reshape(M, in_size)
    total_rows = Mp_pad * p
    if total_rows != M:
        x2d = jnp.zeros((total_rows, in_size), x.dtype).at[:M].set(x2d)
    xp = x2d.reshape(Mp_pad, K)

    grid = (Mp_pad // tmp,)
    out = pl.pallas_call(
        _noise_head_kernel,
        out_shape=jax.ShapeDtypeStruct((Mp_pad, N), jnp.float32),
        grid=grid,
        in_specs=[
            pl.BlockSpec((tmp, K), lambda i: (i, 0)),     # x row tile
            pl.BlockSpec((K, N), lambda i: (0, 0)),       # weight, VMEM-resident
            pl.BlockSpec((1, N), lambda i: (0, 0)),       # bias row, VMEM-resident
        ],
        out_specs=pl.BlockSpec((tmp, N), lambda i: (i, 0)),
        compiler_params=pltpu.CompilerParams(
            dimension_semantics=("parallel",),
        ),
    )(xp, w_blk, b_blk)

    # (Mp_pad, p*nfb) row-major == (Mp_pad*p, nfb) row-major; drop padded rows.
    return out.reshape(Mp_pad * p, nfb)[:M].reshape(B, T, nfb)


def _reference(x, weight, bias):
    y = jnp.einsum("btd,nd->btn", x.astype(jnp.float32),
                   weight.astype(jnp.float32)) + bias.astype(jnp.float32)
    s = jax.nn.sigmoid(y)
    return _MAX_VALUE * s ** _EXPONENT + _THRESHOLD


if __name__ == "__main__":
    key = jax.random.PRNGKey(0)
    B, T, in_size, nfb = 2, 8, 32, 64   # noise_filter_bank = 64

    kx, kw, kb = jax.random.split(key, 3)
    x = jax.random.normal(kx, (B, T, in_size), dtype=jnp.float32)
    # Deterministic synthetic parameters (shapes match nn.Linear(in_size, nfb))
    bound = 1.0 / math.sqrt(in_size)
    weight = jax.random.uniform(kw, (nfb, in_size), minval=-bound, maxval=bound,
                                dtype=jnp.float32)
    bias = jax.random.uniform(kb, (nfb,), minval=-bound, maxval=bound,
                              dtype=jnp.float32)

    out = jax.block_until_ready(noise_head(x, weight, bias))
    ref = _reference(x, weight, bias)

    assert out.shape == (B, T, nfb)
    assert jnp.allclose(out, ref, atol=1e-5, rtol=1e-5), "mismatch vs reference"

    print("KERNEL_OK")
</pallas_src>

<mosaic_0001>
module attributes {stable_mosaic.version = 11 : i64} {
  func.func @_noise_head_kernel(%arg0: i32, %arg1: memref<8x64xf32, #tpu.memory_space<vmem>>, %arg2: memref<64x128xf32, #tpu.memory_space<vmem>>, %arg3: memref<1x128xf32, #tpu.memory_space<vmem>>, %arg4: memref<8x128xf32, #tpu.memory_space<vmem>>) attributes {dimension_semantics = [#tpu.dimension_semantics<parallel>], iteration_bounds = array<i64: 1>, scalar_prefetch = 0 : i64, scratch_operands = 0 : i64, tpu.core_type = #tpu.core_type<tc>, window_params = [{transform_indices = @transform_0, window_bounds = array<i64: 8, 64>}, {pipeline_mode = #tpu.pipeline_mode<synchronous>, transform_indices = @transform_1, window_bounds = array<i64: 64, 128>}, {pipeline_mode = #tpu.pipeline_mode<synchronous>, transform_indices = @transform_2, window_bounds = array<i64: 1, 128>}, {transform_indices = @transform_3, window_bounds = array<i64: 8, 128>}]} {
    %c0 = arith.constant 0 : index
    %c0_0 = arith.constant 0 : index
    %0 = vector.load %arg1[%c0, %c0_0] : memref<8x64xf32, #tpu.memory_space<vmem>>, vector<8x64xf32>
    %c0_1 = arith.constant 0 : index
    %c0_2 = arith.constant 0 : index
    %1 = vector.load %arg2[%c0_1, %c0_2] : memref<64x128xf32, #tpu.memory_space<vmem>>, vector<64x128xf32>
    %cst = arith.constant dense<0.000000e+00> : vector<8x128xf32>
    %2 = tpu.matmul %0, %1, %cst {dimension_numbers = #tpu.dot_dimension_numbers<[1], [0], [0], [1], [0, 0, 1, 1], [], []>} : vector<8x64xf32>, vector<64x128xf32>, vector<8x128xf32> -> vector<8x128xf32>
    %c0_3 = arith.constant 0 : index
    %c0_4 = arith.constant 0 : index
    %3 = vector.load %arg3[%c0_3, %c0_4] : memref<1x128xf32, #tpu.memory_space<vmem>>, vector<1x128xf32>
    %4 = vector.broadcast %3 : vector<1x128xf32> to vector<8x128xf32>
    %5 = arith.addf %2, %4 : vector<8x128xf32>
    %cst_5 = arith.constant 0.000000e+00 : f32
    %6 = vector.broadcast %cst_5 : f32 to vector<8x128xf32>
    %7 = arith.subf %6, %5 : vector<8x128xf32>
    %cst_6 = arith.constant 0.000000e+00 : f32
    %8 = vector.broadcast %cst_6 : f32 to vector<8x128xf32>
    %9 = arith.maximumf %7, %8 : vector<8x128xf32>
    %10 = math.absf %5 : vector<8x128xf32>
    %cst_7 = arith.constant 0.000000e+00 : f32
    %11 = vector.broadcast %cst_7 : f32 to vector<8x128xf32>
    %12 = arith.subf %11, %10 : vector<8x128xf32>
    %13 = math.exp %12 : vector<8x128xf32>
    %cst_8 = arith.constant 1.000000e+00 : f32
    %14 = vector.broadcast %cst_8 : f32 to vector<8x128xf32>
    %15 = arith.addf %14, %13 : vector<8x128xf32>
    %16 = math.log %15 : vector<8x128xf32>
    %17 = arith.addf %9, %16 : vector<8x128xf32>
    %cst_9 = arith.constant 0.000000e+00 : f32
    %18 = vector.broadcast %cst_9 : f32 to vector<8x128xf32>
    %19 = arith.subf %18, %17 : vector<8x128xf32>
    %cst_10 = arith.constant 2.30258512 : f32
    %20 = vector.broadcast %cst_10 : f32 to vector<8x128xf32>
    %21 = arith.mulf %20, %19 : vector<8x128xf32>
    %22 = math.exp %21 : vector<8x128xf32>
    %cst_11 = arith.constant 2.000000e+00 : f32
    %23 = vector.broadcast %cst_11 : f32 to vector<8x128xf32>
    %24 = arith.mulf %23, %22 : vector<8x128xf32>
    %cst_12 = arith.constant 1.000000e-07 : f32
    %25 = vector.broadcast %cst_12 : f32 to vector<8x128xf32>
    %26 = arith.addf %24, %25 : vector<8x128xf32>
    %c0_13 = arith.constant 0 : index
    %c0_14 = arith.constant 0 : index
    %27 = vector.load %arg4[%c0_13, %c0_14] : memref<8x128xf32, #tpu.memory_space<vmem>>, vector<8x128xf32>
    tpu.vector_store %arg4[%c0_13, %c0_14], %26 {strides = array<i32>} : memref<8x128xf32, #tpu.memory_space<vmem>>, vector<8x128xf32>,
    return
  }
  func.func @transform_0(%arg0: i32) -> (i32, i32) {
    %c0_i32 = arith.constant 0 : i32
    %c0_i32_0 = arith.constant 0 : i32
    return %arg0, %c0_i32 : i32, i32
  }
  func.func @transform_1(%arg0: i32) -> (i32, i32) {
    %c0_i32 = arith.constant 0 : i32
    %c0_i32_0 = arith.constant 0 : i32
    %c0_i32_1 = arith.constant 0 : i32
    return %c0_i32, %c0_i32_0 : i32, i32
  }
  func.func @transform_2(%arg0: i32) -> (i32, i32) {
    %c0_i32 = arith.constant 0 : i32
    %c0_i32_0 = arith.constant 0 : i32
    %c0_i32_1 = arith.constant 0 : i32
    return %c0_i32, %c0_i32_0 : i32, i32
  }
  func.func @transform_3(%arg0: i32) -> (i32, i32) {
    %c0_i32 = arith.constant 0 : i32
    %c0_i32_0 = arith.constant 0 : i32
    return %arg0, %c0_i32 : i32, i32
  }
}

</mosaic_0001>

<llo_original>
// kernel: tile.8
$region0: #{tile.8}
  #allocation0 [shape = 's32[1]{0}', space=sflag, size = 0x4, scoped, tag = 'scoped memory for tile.8']
  %s0 = inlined_call_operand.vmem [shape: f32[64], index: 0, kind: input, shape index: {}]
  %s1 = inlined_call_operand.vmem [shape: f32[2,64], index: 1, kind: output, shape index: {}]
  // Predicated region
  $region2: #{tile.8} parent=0 // pred_check
    _
  $region3: #{tile.8} parent=0 // pred_check_branch
    %3 = sbr.rel (0) target = $region5
  $region4: #{tile.8} parent=0 // pred_region
    _
  $region5: #{tile.8} parent=0 // pred_fallthru
    _
  %v4 = vld [vmem:[%s0] ss:$0 sm:$0xff]
  %5 = vst [vmem:[%s1] sm:$0x3] %v4

// kernel: tile.9
$region0: #{tile.9}
  %s0 = inlined_call_operand.vmem [shape: f32[2,64], index: 0, kind: input, shape index: {}]
  %s1 = inlined_call_operand.vmem [shape: f32[1,128], index: 1, kind: output, shape index: {}]
  $region1: #{tile.9} parent=0
    #allocation0 [shape = 'u8[4096]{0}', space=vmem, size = 0x1000, scoped, tag = 'scoped mem for output reshape']
    #allocation1 [shape = 'u8[4096]{0}', space=vmem, size = 0x1000, scoped, tag = 'scoped mem for input reshape']
    %s3 = sshllo.u32 0, 2
    %v4 = vld [vmem:[%s0] sm:%s3]
    %5 = vst [vmem:[#allocation1] sm:%s3] %v4
    %v6 = vld [vmem:[#allocation1] sm:$0x1]
    %vm7 = vcmask 523264
    %8 = vst.msk [vmem:[#allocation0] sm:$0x1] %vm7, %v6
    %s9 = scalar_lea.vmem [#allocation1], 1
    %v10 = vld [vmem:[%s9] sm:$0x1]
    %11 = vrot.lane.b32.xlu0 %v10, 64
    %v12 = vpop.permute.xlu0 %11
    %vm13 = vcmask 1048064
    %14 = vst.msk [vmem:[#allocation0] sm:$0x1] %vm13, %v12
    %s16 = sshllo.u32 0, 1
    %v18 = vld [vmem:[#allocation0] sm:%s16]
    %s19 = sshllo.u32 0, 1
    %20 = vst [vmem:[%s1] sm:%s19] %v18

// kernel: noise_head.1
$region0: #{noise_head.1}
  #allocation0 [shape = 'u32[]', space=smem, size = 0x4, offset = 0x4, fixed_abs, tag = 'smem constant byte address 0x4 - core index']
  #allocation1 [shape = 'u32[144,128]{1,0:T(1,128)}', space=vmem, size = 0x12000, scoped, tag = 'internal scratch']
  %s0 = inlined_call_operand.vmem [shape: f32[8,64], index: 0, kind: input, shape index: {}]
  %s1 = inlined_call_operand.vmem [shape: f32[64,128], index: 1, kind: input, shape index: {}]
  %s2 = inlined_call_operand.vmem [shape: f32[1,128], index: 2, kind: input, shape index: {}]
  %s3 = inlined_call_operand.vmem [shape: f32[8,128], index: 3, kind: output, shape index: {}]
  %s4 = sld [smem:[#allocation0]]
  $region22: #{noise_head.1} parent=0
    _
  %s6 = ssub.s32 1, %s4
  %s7 = scalar_select 0, %s6, %s4
  // Predicated region
  $region2: #{noise_head.1} parent=0 // pred_check
    _
  $region3: #{noise_head.1} parent=0 // pred_check_branch
    %9 = sbr.rel (0) target = $region5
  $region4: #{noise_head.1} parent=0 // pred_region
    _
  $region5: #{noise_head.1} parent=0 // pred_fallthru
    _
  // Predicated region
  $region6: #{noise_head.1} parent=0 // pred_check
    _
  $region7: #{noise_head.1} parent=0 // pred_check_branch
    %11 = sbr.rel (0) target = $region9
  $region8: #{noise_head.1} parent=0 // pred_region
    _
  $region9: #{noise_head.1} parent=0 // pred_fallthru
    _
  // Predicated region
  $region10: #{noise_head.1} parent=0 // pred_check
    _
  $region11: #{noise_head.1} parent=0 // pred_check_branch
    %13 = sbr.rel (0) target = $region13
  $region12: #{noise_head.1} parent=0 // pred_region
    _
  $region13: #{noise_head.1} parent=0 // pred_fallthru
    _
  %v14 = vld [vmem:[%s0] sm:$0xff]
  %v15 = vld [vmem:[%s1] sm:$0xff]
  %v16 = vld [vmem:[%s1 + $0x8] sm:$0xff]
  %v17 = vld [vmem:[%s1 + $0x10] sm:$0xff]
  %v18 = vld [vmem:[%s1 + $0x18] sm:$0xff]
  %v19 = vld [vmem:[%s1 + $0x20] sm:$0xff]
  %v20 = vld [vmem:[%s1 + $0x28] sm:$0xff]
  %v21 = vld [vmem:[%s1 + $0x30] sm:$0xff]
  %v22 = vld [vmem:[%s1 + $0x38] sm:$0xff]
  %v23 = vld [vmem:[%s2] sm:$0x1]
  %v25 = vlaneseq
  %v26 = vshrl.u32 %v25, 7
  %v27 = vsub.s32 0, %v26
  %v28 = vrot.slane %v23, %v27
  %vm30 = vcmask 523264
  %v32 = vsel %vm30, %v14, 0
  %34 = vmatprep.subr.mxu0 0.0
  %35 = vmatpush1.msra.mxu0 %v15
  %36 = vmatprep.subr.mxu0 0.0
  %37 = vmatpush1.msra.mxu0 %v16
  %38 = vmatprep.subr.mxu0 0.0
  %39 = vmatpush1.msra.mxu0 %v17
  %40 = vmatprep.subr.mxu0 0.0
  %41 = vmatpush1.msra.mxu0 %v18
  %42 = vmatprep.subr.mxu0 0.0
  %43 = vmatpush1.msra.mxu0 %v19
  %44 = vmatprep.subr.mxu0 0.0
  %45 = vmatpush1.msra.mxu0 %v20
  %46 = vmatprep.subr.mxu0 0.0
  %47 = vmatpush1.msra.mxu0 %v21
  %48 = vmatprep.subr.mxu0 0.0
  %49 = vmatpush1.msra.mxu0 %v22
  %50 = vmatprep.subr.mxu0 0.0
  %51 = vmatpush1.msra.mxu0 0.0
  %52 = vmatprep.subr.mxu0 0.0
  %53 = vmatpush1.msra.mxu0 0.0
  %54 = vmatprep.subr.mxu0 0.0
  %55 = vmatpush1.msra.mxu0 0.0
  %56 = vmatprep.subr.mxu0 0.0
  %57 = vmatpush1.msra.mxu0 0.0
  %58 = vmatprep.subr.mxu0 0.0
  %59 = vmatpush1.msra.mxu0 0.0
  %60 = vmatprep.subr.mxu0 0.0
  %61 = vmatpush1.msra.mxu0 0.0
  %62 = vmatprep.subr.mxu0 0.0
  %63 = vmatpush1.msra.mxu0 0.0
  %64 = vmatprep.subr.mxu0 0.0
  %65 = vmatpush1.msra.mxu0 0.0
  %66 = vmatprep.subr.mxu0 0.0
  %67 = vmatpush1.msra.mxu0 0.0
  %68 = vmatprep.subr.mxu0 0.0
  %69 = vmatpush1.msra.mxu0 0.0
  %70 = vmatprep.subr.mxu0 0.0
  %71 = vmatpush1.msra.mxu0 0.0
  %72 = vmatprep.subr.mxu0 0.0
  %73 = vmatpush1.msra.mxu0 0.0
  %74 = vmatprep.subr.mxu0 0.0
  %75 = vmatpush1.msra.mxu0 0.0
  %76 = vmatprep.subr.mxu0 0.0
  %77 = vmatpush1.msra.mxu0 0.0
  %78 = vmatprep.subr.mxu0 0.0
  %79 = vmatpush1.msra.mxu0 0.0
  %80 = vmatprep.subr.mxu0 0.0
  %81 = vmatpush1.msra.mxu0 0.0
  %82 = vmatprep.subr.mxu0 0.0
  %83 = vmatpush1.msra.mxu0 0.0
  %84 = vmatprep.subr.mxu0 0.0
  %85 = vmatpush1.msra.mxu0 0.0
  %86 = vmatprep.subr.mxu0 0.0
  %87 = vmatpush1.msra.mxu0 0.0
  %88 = vmatprep.subr.mxu0 0.0
  %89 = vmatpush1.msra.mxu0 0.0
  %90 = vmatprep.subr.mxu0 0.0
  %91 = vmatpush1.msra.mxu0 0.0
  %92 = vmatprep.subr.mxu0 0.0
  %93 = vmatpush1.msra.mxu0 0.0
  %94 = vmatprep.subr.mxu0 0.0
  %95 = vmatpush1.msra.mxu0 0.0
  %96 = vmatprep.subr.mxu0 0.0
  %97 = vmatpush1.msra.mxu0 0.0
  %98 = vmatprep.mubr.f32.mxu0 0.0
  %99 = vmatmul.mubr.f32.gmra.mrb[0].mxu0 %v32
  %v100 = vpop.f32.mrb[0].mxu0
  %v101 = vadd.f32 %v28, %v100
  %v102 = vpop.f32.mrb[0].mxu0
  %103 = vdwg.mxu0
  %v104 = vsub.f32 0.0, %v101
  %v105 = vmax.f32 %v104, 0.0
  %v106 = vand.u32 2147483647, %v101
  %v107 = vsub.f32 0.0, %v106
  %v108 = vmul.f32 %v107, 1.442695
  %v109 = vpow.pop %v108
  %v110 = vadd.f32 %v109, 1.0
  %v111 = vlog2.pop %v110
  %v112 = vmul.f32 %v111, 0.6931472
  %v113 = vadd.f32 %v105, %v112
  %v114 = vsub.f32 0.0, %v113
  %v115 = vmul.f32 %v114, 2.3025851
  %v116 = vmul.f32 %v115, 1.442695
  %v117 = vpow.pop %v116
  %v118 = vmul.f32 %v117, 2.0
  %v119 = vadd.f32 %v118, 1e-07
  %120 = vst [vmem:[%s3] sm:$0xff] %v119
  // Predicated region
  $region14: #{noise_head.1} parent=0 // pred_check
    _
  $region15: #{noise_head.1} parent=0 // pred_check_branch
    %122 = sbr.rel (0) target = $region17
  $region16: #{noise_head.1} parent=0 // pred_region
    _
  $region17: #{noise_head.1} parent=0 // pred_fallthru
    _
  // Predicated region
  $region18: #{noise_head.1} parent=0 // pred_check
    _
  $region19: #{noise_head.1} parent=0 // pred_check_branch
    %124 = sbr.rel (0) target = $region21
  $region20: #{noise_head.1} parent=0 // pred_region
    _
  $region21: #{noise_head.1} parent=0 // pred_fallthru
    _

</llo_original>
